<compile_context>
chip_gen: v6e
topology: v6e:2x2x1
jax: 0.10.0
libtpu: 0.0.40
codegen_flags: <defaults>
</compile_context>

<pallas_src>
import numpy as np
import jax
import jax.numpy as jnp
from jax.experimental import pallas as pl
from jax.experimental.pallas import tpu as pltpu

EPSILON_FP16 = 1e-05

# Clamp bounds mirroring torch.clamp(sigmoid(x), eps, 1-eps) followed by log(),
# including the f32 rounding of (1 - (1 - eps)).
_P_MIN = float(np.float32(EPSILON_FP16))
_P_MAX = float(np.float32(1.0 - EPSILON_FP16))
_LOG_P_MIN = float(np.log(np.float32(_P_MIN)))
_LOG_P_MAX = float(np.log(np.float32(_P_MAX)))
_LOG_1MP_MIN = float(np.log(np.float32(1.0) - np.float32(_P_MAX)))
_LOG_1MP_MAX = float(np.log(np.float32(1.0) - np.float32(_P_MIN)))

LANE = 128
ROW_ALIGN = 32            # int8 sublane tiling alignment
STRIP = 512               # rows per inner sub-strip (bounds live f32 temporaries)
MAX_TM = 8192             # rows per DMA'd tile: x 4 MiB + enc 1 MiB, 2x buffered ~10 MiB
VMEM_LIMIT = 48 * 1024 * 1024   # > v5e's 16 MiB default, < v7x's 64 MiB per TC


def _cdiv(a, b):
    return -(-a // b)


def _round_up(v, m):
    return ((v + m - 1) // m) * m


def _make_kernel(strip, nsub, lane, has_primary):
    """Build the loss kernel specialized on strip size / primary-head presence."""

    def kernel(beta_ref, pbeta_ref, x_ref, enc_ref, out_ref):
        @pl.when(pl.program_id(1) == 0)
        def _init():
            out_ref[...] = jnp.zeros_like(out_ref)

        beta = beta_ref[0]
        omb = 1.0 - beta
        if has_primary:
            pbeta = pbeta_ref[0]
            ompb = 1.0 - pbeta

        def strip_body(r0):
            x = x_ref[pl.ds(r0, strip), :].astype(jnp.float32)     # (strip, lane)
            enc = enc_ref[pl.ds(r0, strip), :].astype(jnp.int32)   # packed metadata

            tbit = (enc & 1) != 0      # multi-label target bit
            valid = enc != 0           # real (non-padding) element

            # Stable log-sigmoid: one exp + one log (EUP), rest VALU.
            #   log p      = -(max(-x,0) + log(1 + exp(-|x|)))
            #   log (1-p)  = log p - x        (exact algebraic identity)
            ax = jnp.abs(x)
            e = jnp.exp(-ax)
            lg = jnp.log(1.0 + e)
            log_p_raw = -(jnp.maximum(-x, 0.0) + lg)
            log_p = jnp.clip(log_p_raw, _LOG_P_MIN, _LOG_P_MAX)
            log_1mp = jnp.clip(log_p_raw - x, _LOG_1MP_MIN, _LOG_1MP_MAX)
            d = log_p - log_1mp
            p = jnp.exp(log_p)         # == clamp(sigmoid(x), eps, 1-eps) to f32 rounding

            # LSoft BCE on all labels, factored around d:
            #   noisy = -(t_upd*log_p + (1-t_upd)*log_1mp) = -(log_1mp + t_upd*d)
            t_upd = jnp.where(tbit, beta + omb * p, 0.0)
            noisy = -(log_1mp + t_upd * d)

            def part(v):
                # (strip, lane) -> (strip/8, 8, lane): tile-aligned reshape, then
                # whole-vreg adds -> one (8, lane) partial per quantity.
                return jnp.sum(v.reshape(strip // 8, 8, lane), axis=0)

            out_ref[0:8, :] += part(jnp.where(valid, noisy, 0.0))   # sum(noisy)
            out_ref[8:16, :] += part(jnp.where(tbit, noisy, 0.0))   # sum(noisy * t)
            out_ref[16:24, :] += part(jnp.where(tbit, 1.0, 0.0))    # sum(t)
            if has_primary:
                t2 = pbeta + ompb * p
                ploss = -(log_1mp + t2 * d)
                out_ref[24:32, :] += part(jnp.where(enc >= 6, ploss, 0.0))

        if nsub > 1:
            @pl.loop(0, nsub)
            def _(i):
                strip_body(pl.multiple_of(i * strip, strip))
        else:
            strip_body(0)

    return kernel


def noisy_controlled_loss(output, target, beta, primary_beta, *, nsplit=1):
    """Forward pass of NoisyControlledLoss.  target = (target_all, target_primary).

    nsplit: leading grid-axis split.  Keep 1 on single-TensorCore chips
    (v5e/v6e); set 2 on v7x to shard rows across both TensorCores
    (the axis is then marked CORE_PARALLEL).
    """
    target_all, target_primary = target
    bs, s, o = target_all.shape
    n = bs * s
    has_primary = target_primary is not None

    x = output.reshape(n, o)                       # native dtype (cast in-kernel)
    t_bit = target_all.reshape(n, o) > 0.5         # hard multi-label targets

    # bit0 = target, bit1 = primary one-hot, bit2 = valid (always set for real elems)
    if has_primary:
        pidx = jnp.asarray(target_primary).reshape(n).astype(jnp.int32)
        onehot = jnp.arange(o, dtype=jnp.int32)[None, :] == pidx[:, None]
        enc = t_bit.astype(jnp.int8) + 2 * onehot.astype(jnp.int8) + 4
    else:
        enc = t_bit.astype(jnp.int8) + 4
    enc = enc.astype(jnp.int8)

    # ---- lane-dense repack plan -------------------------------------------
    fold = (o <= LANE) and (LANE % o == 0)
    if fold:
        lane = LANE
        pack = LANE // o
        rows = _cdiv(n, pack)
    else:
        lane = _round_up(o, LANE)
        rows = n

    # ---- row tiling: big DMA'd tiles, small inner strips -------------------
    per_core = _cdiv(rows, nsplit)
    if per_core > STRIP:
        steps = _cdiv(per_core, MAX_TM)
        tm = _round_up(_cdiv(per_core, steps), STRIP)   # pads < nsplit*steps*STRIP rows
        strip = STRIP
    else:
        steps = 1
        tm = _round_up(max(per_core, 1), ROW_ALIGN)
        strip = tm
    nsub = tm // strip
    total_rows = nsplit * steps * tm

    # ---- repack / single guarded pad ---------------------------------------
    if fold:
        pad = total_rows * lane - n * o
        x_flat = x.reshape(n * o)
        enc_flat = enc.reshape(n * o)
        if pad:
            x_flat = jnp.pad(x_flat, (0, pad))
            enc_flat = jnp.pad(enc_flat, (0, pad))
        x2 = x_flat.reshape(total_rows, lane)
        enc2 = enc_flat.reshape(total_rows, lane)
    else:
        pad_r = total_rows - rows
        pad_l = lane - o
        if pad_r or pad_l:
            x2 = jnp.pad(x, ((0, pad_r), (0, pad_l)))
            enc2 = jnp.pad(enc, ((0, pad_r), (0, pad_l)))
        else:
            x2, enc2 = x, enc

    nq = 4 if has_primary else 3
    beta_a = jnp.reshape(jnp.asarray(beta, dtype=jnp.float32), (1,))
    pbeta_a = jnp.reshape(
        jnp.asarray(primary_beta if has_primary else 0.0, dtype=jnp.float32), (1,))

    data_map = lambda c, j: (c * steps + j, 0)
    if nsplit > 1:
        dims = (pltpu.CORE_PARALLEL, pltpu.ARBITRARY)   # shard rows across TCs (v7x)
    else:
        dims = ("arbitrary", "arbitrary")

    n_elems = total_rows * lane
    cost = pl.CostEstimate(
        flops=int((40 if has_primary else 33) * n_elems),
        transcendentals=int(3 * n_elems),
        bytes_accessed=int(n_elems * (jnp.dtype(x2.dtype).itemsize + 1)
                           + nsplit * nq * 8 * lane * 4),
    )

    partials = pl.pallas_call(
        _make_kernel(strip, nsub, lane, has_primary),
        out_shape=jax.ShapeDtypeStruct((nsplit, nq * 8, lane), jnp.float32),
        grid_spec=pltpu.PrefetchScalarGridSpec(
            num_scalar_prefetch=0,
            grid=(nsplit, steps),
            in_specs=[
                pl.BlockSpec(memory_space=pltpu.MemorySpace.SMEM),   # beta
                pl.BlockSpec(memory_space=pltpu.MemorySpace.SMEM),   # primary_beta
                pl.BlockSpec((tm, lane), data_map),                  # logits
                pl.BlockSpec((tm, lane), data_map),                  # packed targets
            ],
            out_specs=pl.BlockSpec((None, nq * 8, lane), lambda c, j: (c, 0, 0)),
        ),
        compiler_params=pltpu.CompilerParams(
            dimension_semantics=dims,
            vmem_limit_bytes=VMEM_LIMIT),
        cost_estimate=cost,
    )(beta_a, pbeta_a, x2, enc2)

    sums = jnp.sum(partials.reshape(nsplit, nq, 8, lane), axis=(0, 2, 3))
    sum_noisy, sum_noisy_t, sum_t = sums[0], sums[1], sums[2]

    sum_noisy_1mt = sum_noisy - sum_noisy_t          # sum(noisy * (1 - t))
    sum_1mt = jnp.float32(n * o) - sum_t             # sum(1 - t)

    ones_loss = sum_noisy_t / (sum_t + EPSILON_FP16) * 4.0 / 5.0
    zeros_loss = sum_noisy_1mt / (sum_1mt + EPSILON_FP16)
    if has_primary:
        primary_loss = (sums[3] / n) / 5.0
    else:
        primary_loss = jnp.float32(0.0)
    overall_target_loss = ones_loss + primary_loss
    loss = (zeros_loss + overall_target_loss) / 2.0

    return loss, {
        "zeros_loss": zeros_loss,
        "ones_loss": ones_loss,
        "primary_loss": primary_loss,
        "overall_target_loss": overall_target_loss,
    }


def _reference(output, target_all, target_primary, beta, primary_beta):
    """Pure-JAX reference mirroring the PyTorch forward."""
    bs, s, o = target_all.shape
    n = bs * s
    p = jnp.clip(jax.nn.sigmoid(output.astype(jnp.float32)),
                 EPSILON_FP16, 1.0 - EPSILON_FP16).reshape(n, o)
    t = target_all.reshape(n, o).astype(jnp.float32)
    t_upd = (beta * t + (1.0 - beta) * p) * t
    noisy = -(t_upd * jnp.log(p) + (1.0 - t_upd) * jnp.log(1.0 - p))
    ones_loss = (noisy * t).sum() / (t.sum() + EPSILON_FP16) * 4.0 / 5.0
    zeros_loss = (noisy * (1.0 - t)).sum() / ((1.0 - t).sum() + EPSILON_FP16)
    pp = p[jnp.arange(n), jnp.asarray(target_primary).reshape(n)]
    q = primary_beta + (1.0 - primary_beta) * pp
    ploss = -(q * jnp.log(pp) + (1.0 - q) * jnp.log(1.0 - pp))
    primary_loss = ploss.mean() / 5.0
    overall = ones_loss + primary_loss
    loss = (zeros_loss + overall) / 2.0
    return loss, {"zeros_loss": zeros_loss, "ones_loss": ones_loss,
                  "primary_loss": primary_loss, "overall_target_loss": overall}


if __name__ == "__main__":
    key = jax.random.PRNGKey(0)
    k1, k2, k3 = jax.random.split(key, 3)

    bs, s, o = 2, 8, 16
    output = jax.random.normal(k1, (bs, s, o), dtype=jnp.float32)          # logits
    target_all = (jax.random.uniform(k2, (bs, s, o)) < 0.25).astype(jnp.float32)
    target_primary = jax.random.randint(k3, (bs * s, 1), 0, o, dtype=jnp.int32)
    beta = 0.7
    primary_beta = 0.9

    loss, parts = noisy_controlled_loss(output, (target_all, target_primary),
                                        beta, primary_beta)
    loss = jax.block_until_ready(loss)
    jax.block_until_ready(parts)

    ref_loss, ref_parts = _reference(output, target_all, target_primary,
                                     beta, primary_beta)
    assert jnp.allclose(loss, ref_loss, atol=1e-5, rtol=1e-5), (loss, ref_loss)
    for k in parts:
        assert jnp.allclose(parts[k], ref_parts[k], atol=1e-5, rtol=1e-5), (
            k, parts[k], ref_parts[k])

    print("KERNEL_OK")
</pallas_src>

<mosaic_0001>
module attributes {stable_mosaic.version = 11 : i64} {
  func.func @kernel(%arg0: i32, %arg1: i32, %arg2: memref<1xf32, #tpu.memory_space<smem>>, %arg3: memref<1xf32, #tpu.memory_space<smem>>, %arg4: memref<32x128xf32, #tpu.memory_space<vmem>>, %arg5: memref<32x128xi8, #tpu.memory_space<vmem>>, %arg6: memref<1x32x128xf32, #tpu.memory_space<vmem>>) attributes {dimension_semantics = [#tpu.dimension_semantics<arbitrary>, #tpu.dimension_semantics<arbitrary>], iteration_bounds = array<i64: 1, 1>, scalar_prefetch = 0 : i64, scratch_operands = 0 : i64, tpu.core_type = #tpu.core_type<tc>, window_params = [{transform_indices = @transform_0, window_bounds = array<i64: 1>}, {transform_indices = @transform_1, window_bounds = array<i64: 1>}, {transform_indices = @transform_2, window_bounds = array<i64: 32, 128>}, {transform_indices = @transform_3, window_bounds = array<i64: 32, 128>}, {transform_indices = @transform_4, window_bounds = array<i64: 1, 32, 128>}]} {
    %c0_i32 = arith.constant 0 : i32
    %0 = arith.cmpi eq, %arg1, %c0_i32 : i32
    %1 = arith.extui %0 : i1 to i32
    %c0_i32_0 = arith.constant 0 : i32
    %2 = arith.cmpi ne, %1, %c0_i32_0 : i32
    scf.if %2 {
      %cst_51 = arith.constant 0.000000e+00 : f32
      %102 = vector.broadcast %cst_51 : f32 to vector<32x128xf32>
      %c0_52 = arith.constant 0 : index
      %c0_53 = arith.constant 0 : index
      %c0_54 = arith.constant 0 : index
      %103 = vector.load %arg6[%c0_52, %c0_53, %c0_54] : memref<1x32x128xf32, #tpu.memory_space<vmem>>, vector<1x32x128xf32>
      %104 = vector.shape_cast %103 : vector<1x32x128xf32> to vector<32x128xf32>
      %105 = vector.shape_cast %102 : vector<32x128xf32> to vector<1x32x128xf32>
      tpu.vector_store %arg6[%c0_52, %c0_53, %c0_54], %105 {strides = array<i32>} : memref<1x32x128xf32, #tpu.memory_space<vmem>>, vector<1x32x128xf32>,
    } else {
    }
    %c0 = arith.constant 0 : index
    %3 = memref.load %arg2[%c0] : memref<1xf32, #tpu.memory_space<smem>>
    %cst = arith.constant 1.000000e+00 : f32
    %4 = arith.subf %cst, %3 : f32
    %c0_1 = arith.constant 0 : index
    %5 = memref.load %arg3[%c0_1] : memref<1xf32, #tpu.memory_space<smem>>
    %cst_2 = arith.constant 1.000000e+00 : f32
    %6 = arith.subf %cst_2, %5 : f32
    %c0_3 = arith.constant 0 : index
    %c0_4 = arith.constant 0 : index
    %7 = vector.load %arg4[%c0_3, %c0_4] : memref<32x128xf32, #tpu.memory_space<vmem>>, vector<32x128xf32>
    %c0_5 = arith.constant 0 : index
    %c0_6 = arith.constant 0 : index
    %8 = vector.load %arg5[%c0_5, %c0_6] : memref<32x128xi8, #tpu.memory_space<vmem>>, vector<32x128xi8>
    %9 = arith.extsi %8 : vector<32x128xi8> to vector<32x128xi32>
    %c1_i32 = arith.constant 1 : i32
    %10 = vector.broadcast %c1_i32 : i32 to vector<32x128xi32>
    %11 = arith.andi %9, %10 : vector<32x128xi32>
    %c0_i32_7 = arith.constant 0 : i32
    %12 = vector.broadcast %c0_i32_7 : i32 to vector<32x128xi32>
    %13 = arith.cmpi ne, %11, %12 : vector<32x128xi32>
    %c0_i32_8 = arith.constant 0 : i32
    %14 = vector.broadcast %c0_i32_8 : i32 to vector<32x128xi32>
    %15 = arith.cmpi ne, %9, %14 : vector<32x128xi32>
    %16 = math.absf %7 : vector<32x128xf32>
    %cst_9 = arith.constant 0.000000e+00 : f32
    %17 = vector.broadcast %cst_9 : f32 to vector<32x128xf32>
    %18 = arith.subf %17, %16 : vector<32x128xf32>
    %19 = math.exp %18 : vector<32x128xf32>
    %cst_10 = arith.constant 1.000000e+00 : f32
    %20 = vector.broadcast %cst_10 : f32 to vector<32x128xf32>
    %21 = arith.addf %20, %19 : vector<32x128xf32>
    %22 = math.log %21 : vector<32x128xf32>
    %cst_11 = arith.constant 0.000000e+00 : f32
    %23 = vector.broadcast %cst_11 : f32 to vector<32x128xf32>
    %24 = arith.subf %23, %7 : vector<32x128xf32>
    %cst_12 = arith.constant 0.000000e+00 : f32
    %25 = vector.broadcast %cst_12 : f32 to vector<32x128xf32>
    %26 = arith.maximumf %24, %25 : vector<32x128xf32>
    %27 = arith.addf %26, %22 : vector<32x128xf32>
    %cst_13 = arith.constant 0.000000e+00 : f32
    %28 = vector.broadcast %cst_13 : f32 to vector<32x128xf32>
    %29 = arith.subf %28, %27 : vector<32x128xf32>
    %cst_14 = arith.constant -11.5129251 : f32
    %cst_15 = arith.constant -1.00136303E-5 : f32
    %30 = vector.broadcast %cst_14 : f32 to vector<32x128xf32>
    %31 = arith.maximumf %30, %29 : vector<32x128xf32>
    %32 = vector.broadcast %cst_15 : f32 to vector<32x128xf32>
    %33 = arith.minimumf %32, %31 : vector<32x128xf32>
    %34 = arith.subf %29, %7 : vector<32x128xf32>
    %cst_16 = arith.constant -11.5115681 : f32
    %cst_17 = arith.constant -1.00136303E-5 : f32
    %35 = vector.broadcast %cst_16 : f32 to vector<32x128xf32>
    %36 = arith.maximumf %35, %34 : vector<32x128xf32>
    %37 = vector.broadcast %cst_17 : f32 to vector<32x128xf32>
    %38 = arith.minimumf %37, %36 : vector<32x128xf32>
    %39 = arith.subf %33, %38 : vector<32x128xf32>
    %40 = math.exp %33 : vector<32x128xf32>
    %41 = vector.broadcast %4 : f32 to vector<32x128xf32>
    %42 = arith.mulf %41, %40 : vector<32x128xf32>
    %43 = vector.broadcast %3 : f32 to vector<32x128xf32>
    %44 = arith.addf %43, %42 : vector<32x128xf32>
    %cst_18 = arith.constant 0.000000e+00 : f32
    %45 = vector.broadcast %cst_18 : f32 to vector<32x128xf32>
    %46 = arith.select %13, %44, %45 : vector<32x128xi1>, vector<32x128xf32>
    %47 = arith.mulf %46, %39 : vector<32x128xf32>
    %48 = arith.addf %38, %47 : vector<32x128xf32>
    %cst_19 = arith.constant 0.000000e+00 : f32
    %49 = vector.broadcast %cst_19 : f32 to vector<32x128xf32>
    %50 = arith.subf %49, %48 : vector<32x128xf32>
    %c0_20 = arith.constant 0 : index
    %c0_21 = arith.constant 0 : index
    %c0_22 = arith.constant 0 : index
    %51 = vector.load %arg6[%c0_20, %c0_21, %c0_22] : memref<1x32x128xf32, #tpu.memory_space<vmem>>, vector<1x8x128xf32>
    %52 = vector.shape_cast %51 : vector<1x8x128xf32> to vector<8x128xf32>
    %cst_23 = arith.constant 0.000000e+00 : f32
    %53 = vector.broadcast %cst_23 : f32 to vector<32x128xf32>
    %54 = arith.select %15, %50, %53 : vector<32x128xi1>, vector<32x128xf32>
    %55 = vector.shape_cast %54 : vector<32x128xf32> to vector<4x8x128xf32>
    %cst_24 = arith.constant dense<0.000000e+00> : vector<8x128xf32>
    %56 = vector.multi_reduction <add>, %55, %cst_24 [0] : vector<4x8x128xf32> to vector<8x128xf32>
    %57 = arith.addf %52, %56 : vector<8x128xf32>
    %c0_25 = arith.constant 0 : index
    %c0_26 = arith.constant 0 : index
    %c0_27 = arith.constant 0 : index
    %58 = vector.load %arg6[%c0_25, %c0_26, %c0_27] : memref<1x32x128xf32, #tpu.memory_space<vmem>>, vector<1x8x128xf32>
    %59 = vector.shape_cast %58 : vector<1x8x128xf32> to vector<8x128xf32>
    %60 = vector.shape_cast %57 : vector<8x128xf32> to vector<1x8x128xf32>
    tpu.vector_store %arg6[%c0_25, %c0_26, %c0_27], %60 {strides = array<i32>} : memref<1x32x128xf32, #tpu.memory_space<vmem>>, vector<1x8x128xf32>,
    %c0_28 = arith.constant 0 : index
    %c8 = arith.constant 8 : index
    %c0_29 = arith.constant 0 : index
    %61 = vector.load %arg6[%c0_28, %c8, %c0_29] : memref<1x32x128xf32, #tpu.memory_space<vmem>>, vector<1x8x128xf32>
    %62 = vector.shape_cast %61 : vector<1x8x128xf32> to vector<8x128xf32>
    %cst_30 = arith.constant 0.000000e+00 : f32
    %63 = vector.broadcast %cst_30 : f32 to vector<32x128xf32>
    %64 = arith.select %13, %50, %63 : vector<32x128xi1>, vector<32x128xf32>
    %65 = vector.shape_cast %64 : vector<32x128xf32> to vector<4x8x128xf32>
    %cst_31 = arith.constant dense<0.000000e+00> : vector<8x128xf32>
    %66 = vector.multi_reduction <add>, %65, %cst_31 [0] : vector<4x8x128xf32> to vector<8x128xf32>
    %67 = arith.addf %62, %66 : vector<8x128xf32>
    %c0_32 = arith.constant 0 : index
    %c8_33 = arith.constant 8 : index
    %c0_34 = arith.constant 0 : index
    %68 = vector.load %arg6[%c0_32, %c8_33, %c0_34] : memref<1x32x128xf32, #tpu.memory_space<vmem>>, vector<1x8x128xf32>
    %69 = vector.shape_cast %68 : vector<1x8x128xf32> to vector<8x128xf32>
    %70 = vector.shape_cast %67 : vector<8x128xf32> to vector<1x8x128xf32>
    tpu.vector_store %arg6[%c0_32, %c8_33, %c0_34], %70 {strides = array<i32>} : memref<1x32x128xf32, #tpu.memory_space<vmem>>, vector<1x8x128xf32>,
    %c0_35 = arith.constant 0 : index
    %c16 = arith.constant 16 : index
    %c0_36 = arith.constant 0 : index
    %71 = vector.load %arg6[%c0_35, %c16, %c0_36] : memref<1x32x128xf32, #tpu.memory_space<vmem>>, vector<1x8x128xf32>
    %72 = vector.shape_cast %71 : vector<1x8x128xf32> to vector<8x128xf32>
    %cst_37 = arith.constant 1.000000e+00 : f32
    %cst_38 = arith.constant 0.000000e+00 : f32
    %73 = vector.broadcast %cst_37 : f32 to vector<32x128xf32>
    %74 = vector.broadcast %cst_38 : f32 to vector<32x128xf32>
    %75 = arith.select %13, %73, %74 : vector<32x128xi1>, vector<32x128xf32>
    %76 = vector.shape_cast %75 : vector<32x128xf32> to vector<4x8x128xf32>
    %cst_39 = arith.constant dense<0.000000e+00> : vector<8x128xf32>
    %77 = vector.multi_reduction <add>, %76, %cst_39 [0] : vector<4x8x128xf32> to vector<8x128xf32>
    %78 = arith.addf %72, %77 : vector<8x128xf32>
    %c0_40 = arith.constant 0 : index
    %c16_41 = arith.constant 16 : index
    %c0_42 = arith.constant 0 : index
    %79 = vector.load %arg6[%c0_40, %c16_41, %c0_42] : memref<1x32x128xf32, #tpu.memory_space<vmem>>, vector<1x8x128xf32>
    %80 = vector.shape_cast %79 : vector<1x8x128xf32> to vector<8x128xf32>
    %81 = vector.shape_cast %78 : vector<8x128xf32> to vector<1x8x128xf32>
    tpu.vector_store %arg6[%c0_40, %c16_41, %c0_42], %81 {strides = array<i32>} : memref<1x32x128xf32, #tpu.memory_space<vmem>>, vector<1x8x128xf32>,
    %82 = vector.broadcast %6 : f32 to vector<32x128xf32>
    %83 = arith.mulf %82, %40 : vector<32x128xf32>
    %84 = vector.broadcast %5 : f32 to vector<32x128xf32>
    %85 = arith.addf %84, %83 : vector<32x128xf32>
    %86 = arith.mulf %85, %39 : vector<32x128xf32>
    %87 = arith.addf %38, %86 : vector<32x128xf32>
    %cst_43 = arith.constant 0.000000e+00 : f32
    %88 = vector.broadcast %cst_43 : f32 to vector<32x128xf32>
    %89 = arith.subf %88, %87 : vector<32x128xf32>
    %c0_44 = arith.constant 0 : index
    %c24 = arith.constant 24 : index
    %c0_45 = arith.constant 0 : index
    %90 = vector.load %arg6[%c0_44, %c24, %c0_45] : memref<1x32x128xf32, #tpu.memory_space<vmem>>, vector<1x8x128xf32>
    %91 = vector.shape_cast %90 : vector<1x8x128xf32> to vector<8x128xf32>
    %c6_i32 = arith.constant 6 : i32
    %92 = vector.broadcast %c6_i32 : i32 to vector<32x128xi32>
    %93 = arith.cmpi sge, %9, %92 : vector<32x128xi32>
    %cst_46 = arith.constant 0.000000e+00 : f32
    %94 = vector.broadcast %cst_46 : f32 to vector<32x128xf32>
    %95 = arith.select %93, %89, %94 : vector<32x128xi1>, vector<32x128xf32>
    %96 = vector.shape_cast %95 : vector<32x128xf32> to vector<4x8x128xf32>
    %cst_47 = arith.constant dense<0.000000e+00> : vector<8x128xf32>
    %97 = vector.multi_reduction <add>, %96, %cst_47 [0] : vector<4x8x128xf32> to vector<8x128xf32>
    %98 = arith.addf %91, %97 : vector<8x128xf32>
    %c0_48 = arith.constant 0 : index
    %c24_49 = arith.constant 24 : index
    %c0_50 = arith.constant 0 : index
    %99 = vector.load %arg6[%c0_48, %c24_49, %c0_50] : memref<1x32x128xf32, #tpu.memory_space<vmem>>, vector<1x8x128xf32>
    %100 = vector.shape_cast %99 : vector<1x8x128xf32> to vector<8x128xf32>
    %101 = vector.shape_cast %98 : vector<8x128xf32> to vector<1x8x128xf32>
    tpu.vector_store %arg6[%c0_48, %c24_49, %c0_50], %101 {strides = array<i32>} : memref<1x32x128xf32, #tpu.memory_space<vmem>>, vector<1x8x128xf32>,
    return
  }
  func.func @transform_0(%arg0: i32, %arg1: i32) -> i32 {
    %c0_i32 = arith.constant 0 : i32
    %c0_i32_0 = arith.constant 0 : i32
    return %c0_i32 : i32
  }
  func.func @transform_1(%arg0: i32, %arg1: i32) -> i32 {
    %c0_i32 = arith.constant 0 : i32
    %c0_i32_0 = arith.constant 0 : i32
    return %c0_i32 : i32
  }
  func.func @transform_2(%arg0: i32, %arg1: i32) -> (i32, i32) {
    %c1_i32 = arith.constant 1 : i32
    %0 = arith.muli %arg0, %c1_i32 : i32
    %1 = arith.addi %0, %arg1 : i32
    %c0_i32 = arith.constant 0 : i32
    %c0_i32_0 = arith.constant 0 : i32
    return %1, %c0_i32 : i32, i32
  }
  func.func @transform_3(%arg0: i32, %arg1: i32) -> (i32, i32) {
    %c1_i32 = arith.constant 1 : i32
    %0 = arith.muli %arg0, %c1_i32 : i32
    %1 = arith.addi %0, %arg1 : i32
    %c0_i32 = arith.constant 0 : i32
    %c0_i32_0 = arith.constant 0 : i32
    return %1, %c0_i32 : i32, i32
  }
  func.func @transform_4(%arg0: i32, %arg1: i32) -> (i32, i32, i32) {
    %c0_i32 = arith.constant 0 : i32
    %c0_i32_0 = arith.constant 0 : i32
    %c0_i32_1 = arith.constant 0 : i32
    return %arg0, %c0_i32, %c0_i32_0 : i32, i32, i32
  }
}

</mosaic_0001>

<llo_original>
// kernel: tpu_custom_call.1
$region0: #{tpu_custom_call.1}
  #allocation0 [shape = 'u32[]', space=smem, size = 0x4, offset = 0x4, fixed_abs, tag = 'smem constant byte address 0x4 - core index']
  #allocation1 [shape = 'u32[144,128]{1,0:T(1,128)}', space=vmem, size = 0x12000, scoped, tag = 'internal scratch']
  #allocation2 [shape = 'f32[1]{0:T(128)S(6)}', space=smem, size = 0x200, scoped, tag = 'scoped memory for tpu_custom_call.1']
  #allocation3 [shape = 'f32[1]{0:T(128)S(6)}', space=smem, size = 0x200, scoped, tag = 'scoped memory for tpu_custom_call.1']
  %s0 = inlined_call_operand.<no memory space> [shape: f32[1], index: 0, kind: input, shape index: {}]
  %s1 = inlined_call_operand.<no memory space> [shape: f32[1], index: 1, kind: input, shape index: {}]
  %s2 = inlined_call_operand.hbm [shape: f32[32,128], index: 2, kind: input, shape index: {}]
  %s3 = inlined_call_operand.hbm [shape: s8[32,128], index: 3, kind: input, shape index: {}]
  %s4 = inlined_call_operand.hbm [shape: f32[1,32,128], index: 4, kind: output, shape index: {}]
  %s5 = sld [smem:[#allocation0]]
  $region38: #{tpu_custom_call.1} parent=0
    _
  %s7 = ssub.s32 1, %s5
  %s8 = scalar_select 0, %s7, %s5
  %9 = sst [smem:[#allocation2]] %s0
  %10 = sst [smem:[#allocation3]] %s1
  $region1: #{tpu_custom_call.1} parent=0
    #allocation4 [shape = 'u8[16384]{0}', space=vmem, size = 0x4000, scoped, tag = 'input window, operand 2, single buffered']
    #allocation5 [shape = 's32[1]{0}', space=sflag, size = 0x4, scoped, tag = 'scoped memory for tpu_custom_call.1']
    #allocation6 [shape = 's32[1]{0}', space=sflag, size = 0x4, scoped, tag = 'scoped memory for tpu_custom_call.1']
    #allocation7 [shape = 'u8[4096]{0}', space=vmem, size = 0x1000, scoped, tag = 'input window, operand 3, single buffered']
    #allocation8 [shape = 's32[1]{0}', space=sflag, size = 0x4, scoped, tag = 'scoped memory for tpu_custom_call.1']
    #allocation9 [shape = 'u8[16384]{0}', space=vmem, size = 0x4000, scoped, tag = 'output window, operand 0, single buffered']
    %11 = vsyncpa [#allocation5], 0
    %12 = vsyncpa [#allocation8], 0
    %13 = vsyncpa [#allocation6], 0
    // Predicated region
    $region2: #{tpu_custom_call.1} parent=1 // pred_check
      _
    $region3: #{tpu_custom_call.1} parent=1 // pred_check_branch
      %15 = sbr.rel (0) target = $region5
    $region4: #{tpu_custom_call.1} parent=1 // pred_region
      _
    $region5: #{tpu_custom_call.1} parent=1 // pred_fallthru
      _
    // Predicated region
    $region6: #{tpu_custom_call.1} parent=1 // pred_check
      _
    $region7: #{tpu_custom_call.1} parent=1 // pred_check_branch
      %17 = sbr.rel (0) target = $region9
    $region8: #{tpu_custom_call.1} parent=1 // pred_region
      _
    $region9: #{tpu_custom_call.1} parent=1 // pred_fallthru
      _
    // Predicated region
    $region10: #{tpu_custom_call.1} parent=1 // pred_check
      _
    $region11: #{tpu_custom_call.1} parent=1 // pred_check_branch
      %19 = sbr.rel (0) target = $region13
    $region12: #{tpu_custom_call.1} parent=1 // pred_region
      %s20 = sadd.s32 0, 0
      %s21 = smul.u32 4, %s20
      %s23 = ssub.s32 512, 512
      %24 = vsyncadd [#allocation5], %s23
      %s25 = smul.addr %s21, 128
      %s26 = scalar_lea.hbm %s2, %s25
      %s27 = sshll.u32 [#allocation4], 4
      %s28 = int_to_ptr.vmem [resolvable:$true] %s27
      %33 = dma.hbm_to_vmem [thread:$0]  %s26, 512, %s28, [#allocation5], 128, 128, 8
    $region13: #{tpu_custom_call.1} parent=1 // pred_fallthru
      _
    // Predicated region
    $region14: #{tpu_custom_call.1} parent=1 // pred_check
      _
    $region15: #{tpu_custom_call.1} parent=1 // pred_check_branch
      %35 = sbr.rel (0) target = $region17
    $region16: #{tpu_custom_call.1} parent=1 // pred_region
      %s36 = sadd.s32 0, 0
      %s38 = ssub.s32 128, 128
      %39 = vsyncadd [#allocation8], %s38
      %s40 = smul.addr %s36, 128
      %s41 = scalar_lea.hbm %s3, %s40
      %s43 = sshll.u32 [#allocation7], 4
      %s44 = int_to_ptr.vmem [resolvable:$true] %s43
      %46 = dma.hbm_to_vmem [thread:$0]  %s41, 128, %s44, [#allocation8]
    $region17: #{tpu_custom_call.1} parent=1 // pred_fallthru
      _
    // Predicated region
    $region18: #{tpu_custom_call.1} parent=1 // pred_check
      _
    $region19: #{tpu_custom_call.1} parent=1 // pred_check_branch
      %48 = sbr.rel (0) target = $region21
    $region20: #{tpu_custom_call.1} parent=1 // pred_region
      %49 = dma.done [#allocation5], 512
    $region21: #{tpu_custom_call.1} parent=1 // pred_fallthru
      _
    // Predicated region
    $region22: #{tpu_custom_call.1} parent=1 // pred_check
      _
    $region23: #{tpu_custom_call.1} parent=1 // pred_check_branch
      %51 = sbr.rel (0) target = $region25
    $region24: #{tpu_custom_call.1} parent=1 // pred_region
      %52 = dma.done [#allocation8], 128
    $region25: #{tpu_custom_call.1} parent=1 // pred_fallthru
      _
    %s53 = sadd.s32 0, 0
    %s54 = smul.u32 4, %s53
    %s55 = sadd.s32 0, 0
    %p56 = scmp.eq.s32.totalorder 0, 0
    // Predicated region
    $region26: #{tpu_custom_call.1} parent=1 // pred_check
      %p57 = pneg %p56
    $region27: #{tpu_custom_call.1} parent=1 // pred_check_branch
      %59 = sbr.rel (%p57) target = $region29
    $region28: #{tpu_custom_call.1} parent=1 // pred_region
      %60 = vst [vmem:[#allocation9] sm:$0xff] 0.0
      %61 = vst [vmem:[#allocation9 + $0x8] sm:$0xff] 0.0
      %62 = vst [vmem:[#allocation9 + $0x10] sm:$0xff] 0.0
      %63 = vst [vmem:[#allocation9 + $0x18] sm:$0xff] 0.0
    $region29: #{tpu_custom_call.1} parent=1 // pred_fallthru
      _
    %s64 = sld [smem:[#allocation2]]
    %s65 = ssub.f32 1.0, %s64
    %s66 = sld [smem:[#allocation3]]
    %s67 = ssub.f32 1.0, %s66
    %v68 = vld [vmem:[#allocation4] sm:$0xff]
    %v69 = vld [vmem:[#allocation4 + $0x8] sm:$0xff]
    %v70 = vld [vmem:[#allocation4 + $0x10] sm:$0xff]
    %v71 = vld [vmem:[#allocation4 + $0x18] sm:$0xff]
    %v72 = vld [vmem:[#allocation7] sm:$0xff]
    %v73 = vunpack.c.0.s8 %v72
    %v74 = vunpack.c.1.s8 %v72
    %v75 = vunpack.c.2.s8 %v72
    %v76 = vunpack.c.3.s8 %v72
    %v77 = vand.u32 %v73, 1
    %v78 = vand.u32 %v74, 1
    %v79 = vand.u32 %v75, 1
    %v80 = vand.u32 %v76, 1
    %vm81 = vcmp.ne.s32.totalorder %v77, 0
    %vm82 = vcmp.ne.s32.totalorder %v78, 0
    %vm83 = vcmp.ne.s32.totalorder %v79, 0
    %vm84 = vcmp.ne.s32.totalorder %v80, 0
    %vm85 = vcmp.ne.s32.totalorder %v73, 0
    %vm86 = vcmp.ne.s32.totalorder %v74, 0
    %vm87 = vcmp.ne.s32.totalorder %v75, 0
    %vm88 = vcmp.ne.s32.totalorder %v76, 0
    %v89 = vand.u32 2147483647, %v68
    %v90 = vand.u32 2147483647, %v69
    %v91 = vand.u32 2147483647, %v70
    %v92 = vand.u32 2147483647, %v71
    %v93 = vsub.f32 0.0, %v89
    %v94 = vsub.f32 0.0, %v90
    %v95 = vsub.f32 0.0, %v91
    %v96 = vsub.f32 0.0, %v92
    %v97 = vmul.f32 %v93, 1.442695
    %v98 = vpow.pop %v97
    %v99 = vmul.f32 %v94, 1.442695
    %v100 = vpow.pop %v99
    %v101 = vmul.f32 %v95, 1.442695
    %v102 = vpow.pop %v101
    %v103 = vmul.f32 %v96, 1.442695
    %v104 = vpow.pop %v103
    %v105 = vadd.f32 %v98, 1.0
    %v106 = vadd.f32 %v100, 1.0
    %v107 = vadd.f32 %v102, 1.0
    %v108 = vadd.f32 %v104, 1.0
    %v109 = vlog2.pop %v105
    %v110 = vmul.f32 %v109, 0.6931472
    %v111 = vlog2.pop %v106
    %v112 = vmul.f32 %v111, 0.6931472
    %v113 = vlog2.pop %v107
    %v114 = vmul.f32 %v113, 0.6931472
    %v115 = vlog2.pop %v108
    %v116 = vmul.f32 %v115, 0.6931472
    %v117 = vsub.f32 0.0, %v68
    %v118 = vsub.f32 0.0, %v69
    %v119 = vsub.f32 0.0, %v70
    %v120 = vsub.f32 0.0, %v71
    %v121 = vmax.f32 %v117, 0.0
    %v122 = vmax.f32 %v118, 0.0
    %v123 = vmax.f32 %v119, 0.0
    %v124 = vmax.f32 %v120, 0.0
    %v125 = vadd.f32 %v121, %v110
    %v126 = vadd.f32 %v122, %v112
    %v127 = vadd.f32 %v123, %v114
    %v128 = vadd.f32 %v124, %v116
    %v129 = vsub.f32 0.0, %v125
    %v130 = vsub.f32 0.0, %v126
    %v131 = vsub.f32 0.0, %v127
    %v132 = vsub.f32 0.0, %v128
    %v133 = vmax.f32 %v129, -11.512925
    %v134 = vmax.f32 %v130, -11.512925
    %v135 = vmax.f32 %v131, -11.512925
    %v136 = vmax.f32 %v132, -11.512925
    %v137 = vmin.f32 %v133, -1.001363e-05
    %v138 = vmin.f32 %v134, -1.001363e-05
    %v139 = vmin.f32 %v135, -1.001363e-05
    %v140 = vmin.f32 %v136, -1.001363e-05
    %v141 = vsub.f32 %v129, %v68
    %v142 = vsub.f32 %v130, %v69
    %v143 = vsub.f32 %v131, %v70
    %v144 = vsub.f32 %v132, %v71
    %v145 = vmax.f32 %v141, -11.511568
    %v146 = vmax.f32 %v142, -11.511568
    %v147 = vmax.f32 %v143, -11.511568
    %v148 = vmax.f32 %v144, -11.511568
    %v149 = vmin.f32 %v145, -1.001363e-05
    %v150 = vmin.f32 %v146, -1.001363e-05
    %v151 = vmin.f32 %v147, -1.001363e-05
    %v152 = vmin.f32 %v148, -1.001363e-05
    %v153 = vsub.f32 %v137, %v149
    %v154 = vsub.f32 %v138, %v150
    %v155 = vsub.f32 %v139, %v151
    %v156 = vsub.f32 %v140, %v152
    %v157 = vmul.f32 %v137, 1.442695
    %v158 = vpow.pop %v157
    %v159 = vmul.f32 %v138, 1.442695
    %v160 = vpow.pop %v159
    %v161 = vmul.f32 %v139, 1.442695
    %v162 = vpow.pop %v161
    %v163 = vmul.f32 %v140, 1.442695
    %v164 = vpow.pop %v163
    %v165 = vstv %s65
    %v166 = vmul.f32 %v165, %v158
    %v167 = vmul.f32 %v165, %v160
    %v168 = vmul.f32 %v165, %v162
    %v169 = vmul.f32 %v165, %v164
    %v170 = vstv %s64
    %v171 = vadd.f32 %v170, %v166
    %v172 = vadd.f32 %v170, %v167
    %v173 = vadd.f32 %v170, %v168
    %v174 = vadd.f32 %v170, %v169
    %v175 = vsel %vm81, %v171, 0.0
    %v176 = vsel %vm82, %v172, 0.0
    %v177 = vsel %vm83, %v173, 0.0
    %v178 = vsel %vm84, %v174, 0.0
    %v179 = vmul.f32 %v175, %v153
    %v180 = vmul.f32 %v176, %v154
    %v181 = vmul.f32 %v177, %v155
    %v182 = vmul.f32 %v178, %v156
    %v183 = vadd.f32 %v149, %v179
    %v184 = vadd.f32 %v150, %v180
    %v185 = vadd.f32 %v151, %v181
    %v186 = vadd.f32 %v152, %v182
    %v187 = vsub.f32 0.0, %v183
    %v188 = vsub.f32 0.0, %v184
    %v189 = vsub.f32 0.0, %v185
    %v190 = vsub.f32 0.0, %v186
    %v191 = vld [vmem:[#allocation9] sm:$0xff]
    %v192 = vsel %vm85, %v187, 0.0
    %v193 = vsel %vm86, %v188, 0.0
    %v194 = vsel %vm87, %v189, 0.0
    %v195 = vsel %vm88, %v190, 0.0
    %v196 = vadd.f32 %v192, %v193
    %v197 = vadd.f32 %v196, %v194
    %v198 = vadd.f32 %v197, %v195
    %v199 = vadd.f32 %v191, %v198
    %200 = vst [vmem:[#allocation9] sm:$0xff] %v199
    %v201 = vld [vmem:[#allocation9 + $0x8] sm:$0xff]
    %v202 = vsel %vm81, %v187, 0.0
    %v203 = vsel %vm82, %v188, 0.0
    %v204 = vsel %vm83, %v189, 0.0
    %v205 = vsel %vm84, %v190, 0.0
    %v206 = vadd.f32 %v202, %v203
    %v207 = vadd.f32 %v206, %v204
    %v208 = vadd.f32 %v207, %v205
    %v209 = vadd.f32 %v201, %v208
    %210 = vst [vmem:[#allocation9 + $0x8] sm:$0xff] %v209
    %v211 = vld [vmem:[#allocation9 + $0x10] sm:$0xff]
    %v212 = vsel %vm81, 1.0, 0.0
    %v213 = vsel %vm82, 1.0, 0.0
    %v214 = vsel %vm83, 1.0, 0.0
    %v215 = vsel %vm84, 1.0, 0.0
    %v216 = vadd.f32 %v212, %v213
    %v217 = vadd.f32 %v216, %v214
    %v218 = vadd.f32 %v217, %v215
    %v219 = vadd.f32 %v211, %v218
    %220 = vst [vmem:[#allocation9 + $0x10] sm:$0xff] %v219
    %v221 = vstv %s67
    %v222 = vmul.f32 %v221, %v158
    %v223 = vmul.f32 %v221, %v160
    %v224 = vmul.f32 %v221, %v162
    %v225 = vmul.f32 %v221, %v164
    %v226 = vstv %s66
    %v227 = vadd.f32 %v226, %v222
    %v228 = vadd.f32 %v226, %v223
    %v229 = vadd.f32 %v226, %v224
    %v230 = vadd.f32 %v226, %v225
    %v231 = vmul.f32 %v227, %v153
    %v232 = vmul.f32 %v228, %v154
    %v233 = vmul.f32 %v229, %v155
    %v234 = vmul.f32 %v230, %v156
    %v235 = vadd.f32 %v149, %v231
    %v236 = vadd.f32 %v150, %v232
    %v237 = vadd.f32 %v151, %v233
    %v238 = vadd.f32 %v152, %v234
    %v239 = vsub.f32 0.0, %v235
    %v240 = vsub.f32 0.0, %v236
    %v241 = vsub.f32 0.0, %v237
    %v242 = vsub.f32 0.0, %v238
    %v243 = vld [vmem:[#allocation9 + $0x18] sm:$0xff]
    %vm244 = vcmp.ge.s32.totalorder %v73, 6
    %vm245 = vcmp.ge.s32.totalorder %v74, 6
    %vm246 = vcmp.ge.s32.totalorder %v75, 6
    %vm247 = vcmp.ge.s32.totalorder %v76, 6
    %v248 = vsel %vm244, %v239, 0.0
    %v249 = vsel %vm245, %v240, 0.0
    %v250 = vsel %vm246, %v241, 0.0
    %v251 = vsel %vm247, %v242, 0.0
    %v252 = vadd.f32 %v248, %v249
    %v253 = vadd.f32 %v252, %v250
    %v254 = vadd.f32 %v253, %v251
    %v255 = vadd.f32 %v243, %v254
    %256 = vst [vmem:[#allocation9 + $0x18] sm:$0xff] %v255
    // Predicated region
    $region30: #{tpu_custom_call.1} parent=1 // pred_check
      _
    $region31: #{tpu_custom_call.1} parent=1 // pred_check_branch
      %258 = sbr.rel (0) target = $region33
    $region32: #{tpu_custom_call.1} parent=1 // pred_region
      %s260 = ssub.s32 512, 512
      %261 = vsyncadd [#allocation6], %s260
      %s262 = sshll.u32 [#allocation9], 4
      %s263 = int_to_ptr.vmem [resolvable:$true] %s262
      %268 = dma.vmem_to_hbm [thread:$0]  %s263, 512, %s4, [#allocation6], 128, 128, 8
    $region33: #{tpu_custom_call.1} parent=1 // pred_fallthru
      _
    // Predicated region
    $region34: #{tpu_custom_call.1} parent=1 // pred_check
      _
    $region35: #{tpu_custom_call.1} parent=1 // pred_check_branch
      %270 = sbr.rel (0) target = $region37
    $region36: #{tpu_custom_call.1} parent=1 // pred_region
      %271 = dma.done [#allocation6], 512
    $region37: #{tpu_custom_call.1} parent=1 // pred_fallthru
      _
    %272 = vsyncpa [#allocation5], 1
    %273 = vsyncpa [#allocation8], 1
    %274 = vsyncpa [#allocation6], 1

</llo_original>
